<compile_context>
chip_gen: v5e
topology: v5e:2x2
jax: 0.10.0
libtpu: 0.0.40
codegen_flags: <defaults>
</compile_context>

<pallas_src>
import jax
import jax.numpy as jnp
from jax.experimental import pallas as pl
from jax.experimental.pallas import tpu as pltpu


def _mlp_kernel(x_ref, w1_ref, b1_ref, w2_ref, b2_ref, o_ref):
    # x_ref : (1, C_in, R_blk, 128)   VMEM (f32 or bf16)
    # w1_ref: (C_in, C_mid)           SMEM f32 scalars
    # b1_ref: (C_mid,)                SMEM f32 scalars
    # w2_ref: (C_mid, C_out)          SMEM f32 scalars
    # b2_ref: (C_out,)                SMEM f32 scalars
    # o_ref : (1, C_out, R_blk, 128)  VMEM f32
    c_in = x_ref.shape[1]
    c_mid = w1_ref.shape[1]
    c_out = w2_ref.shape[1]

    # Load each input channel once as a fully packed (R_blk, 128) slab.
    xs = [x_ref[0, k].astype(jnp.float32) for k in range(c_in)]

    # Layer 1 (1x1 conv) + ReLU: unrolled VPU MACs with SMEM scalar weights.
    hs = []
    for m in range(c_mid):
        acc = xs[0] * w1_ref[0, m]
        for k in range(1, c_in):
            acc = acc + xs[k] * w1_ref[k, m]
        hs.append(jnp.maximum(acc + b1_ref[m], 0.0))

    # Layer 2 (1x1 conv): one lane-dense full-tile store per output channel.
    for c in range(c_out):
        acc = hs[0] * w2_ref[0, c]
        for m in range(1, c_mid):
            acc = acc + hs[m] * w2_ref[m, c]
        o_ref[0, c] = (acc + b2_ref[c]).astype(o_ref.dtype)


def mlp_pallas(x_nchw, w1, b1, w2, b2, *, spatial_tile=32768, stream_bf16=False):
    """x_nchw: (N, C_in, H, W). w1: (C_in, C_mid), b1: (C_mid,),
    w2: (C_mid, C_out), b2: (C_out,). Returns (N, C_out, H, W) float32."""
    N, C_in, H, W = x_nchw.shape
    C_mid = w1.shape[1]
    C_out = w2.shape[1]
    S = H * W

    # (N, C, H, W) -> (N, C, S): free reshape; channels stay on sublanes,
    # spatial goes onto lanes (no transpose through HBM).
    x3 = x_nchw.reshape(N, C_in, S)
    if stream_bf16:
        x3 = x3.astype(jnp.bfloat16)  # halve streamed bytes; math stays f32

    # Pad spatial to a multiple of 128 lanes only if needed.
    pad = (-S) % 128
    if pad:
        x3 = jnp.pad(x3, ((0, 0), (0, 0), (0, pad)))
    S_pad = S + pad
    R = S_pad // 128                       # sublane-rows of 128 pixels each
    x4 = x3.reshape(N, C_in, R, 128)       # free reshape

    # Spatial rows per grid step: big tiles amortize per-step overhead while
    # staying tiny vs. VMEM (double-buffered blocks are a few MiB at most).
    r_max = max(8, spatial_tile // 128)    # multiple of 8
    r_blk = R if R <= r_max else r_max     # full dim or (8,128)-aligned tile
    grid = (N, pl.cdiv(R, r_blk))          # ragged tail handled by clipping

    w1 = w1.astype(jnp.float32)
    b1 = b1.astype(jnp.float32)
    w2 = w2.astype(jnp.float32)
    b2 = b2.astype(jnp.float32)

    smem = pl.BlockSpec(memory_space=pltpu.MemorySpace.SMEM)

    out4 = pl.pallas_call(
        _mlp_kernel,
        out_shape=jax.ShapeDtypeStruct((N, C_out, R, 128), jnp.float32),
        grid_spec=pltpu.PrefetchScalarGridSpec(
            num_scalar_prefetch=0,
            grid=grid,
            in_specs=[
                pl.BlockSpec((1, C_in, r_blk, 128), lambda n, r: (n, 0, r, 0)),
                smem,   # w1
                smem,   # b1
                smem,   # w2
                smem,   # b2
            ],
            out_specs=pl.BlockSpec((1, C_out, r_blk, 128),
                                   lambda n, r: (n, 0, r, 0)),
        ),
        compiler_params=pltpu.CompilerParams(
            dimension_semantics=("parallel", "parallel")),
    )(x4, w1, b1, w2, b2)

    out3 = out4.reshape(N, C_out, S_pad)
    if pad:
        out3 = out3[:, :, :S]
    return out3.reshape(N, C_out, H, W)


def init_params(key, in_ch, out_ch):
    """Deterministic synthetic init mirroring the module's parameter shapes.
    Torch Conv2d weights are (out, in, 1, 1); stored here transposed as
    (in, out) matmul weights."""
    mid_ch = out_ch * 2
    k1, k2, k3, k4 = jax.random.split(key, 4)
    w1 = jax.random.uniform(k1, (in_ch, mid_ch), jnp.float32,
                            -1.0, 1.0) / jnp.sqrt(in_ch)
    b1 = jax.random.uniform(k2, (mid_ch,), jnp.float32,
                            -1.0, 1.0) / jnp.sqrt(in_ch)
    w2 = jax.random.uniform(k3, (mid_ch, out_ch), jnp.float32,
                            -1.0, 1.0) / jnp.sqrt(mid_ch)
    b2 = jax.random.uniform(k4, (out_ch,), jnp.float32,
                            -1.0, 1.0) / jnp.sqrt(mid_ch)
    return w1, b1, w2, b2


def mlp_reference(x_nchw, w1, b1, w2, b2):
    """Plain-JAX reference matching torch 1x1 conv + ReLU + 1x1 conv."""
    x = jnp.transpose(x_nchw, (0, 2, 3, 1))          # NHWC
    h = jnp.maximum(x @ w1 + b1, 0.0)
    y = h @ w2 + b2
    return jnp.transpose(y, (0, 3, 1, 2))            # NCHW


if __name__ == "__main__":
    key = jax.random.PRNGKey(0)
    kx, kp = jax.random.split(key)

    N, in_ch, H, W = 2, 4, 16, 16
    out_ch = 4

    x = jax.random.normal(kx, (N, in_ch, H, W), jnp.float32)
    w1, b1, w2, b2 = init_params(kp, in_ch, out_ch)

    y = jax.block_until_ready(mlp_pallas(x, w1, b1, w2, b2))
    y_ref = mlp_reference(x, w1, b1, w2, b2)
    assert y.shape == (N, out_ch, H, W)
    assert jnp.allclose(y, y_ref, atol=1e-5, rtol=1e-5)

    # bf16 activation streaming (bandwidth optimization, esp. v6e/v7x); f32
    # accumulation, so only input rounding error -> loose tolerance.
    y_bf16 = jax.block_until_ready(
        mlp_pallas(x, w1, b1, w2, b2, stream_bf16=True))
    assert jnp.allclose(y_bf16, y_ref, atol=5e-2, rtol=5e-2)

    print("KERNEL_OK")
</pallas_src>

<mosaic_0001>
module attributes {stable_mosaic.version = 11 : i64} {
  func.func @_mlp_kernel(%arg0: i32, %arg1: i32, %arg2: memref<1x4x2x128xf32, #tpu.memory_space<vmem>>, %arg3: memref<4x8xf32, #tpu.memory_space<smem>>, %arg4: memref<8xf32, #tpu.memory_space<smem>>, %arg5: memref<8x4xf32, #tpu.memory_space<smem>>, %arg6: memref<4xf32, #tpu.memory_space<smem>>, %arg7: memref<1x4x2x128xf32, #tpu.memory_space<vmem>>) attributes {dimension_semantics = [#tpu.dimension_semantics<parallel>, #tpu.dimension_semantics<parallel>], iteration_bounds = array<i64: 2, 1>, scalar_prefetch = 0 : i64, scratch_operands = 0 : i64, tpu.core_type = #tpu.core_type<tc>, window_params = [{transform_indices = @transform_0, window_bounds = array<i64: 1, 4, 2, 128>}, {transform_indices = @transform_1, window_bounds = array<i64: 4, 8>}, {transform_indices = @transform_2, window_bounds = array<i64: 8>}, {transform_indices = @transform_3, window_bounds = array<i64: 8, 4>}, {transform_indices = @transform_4, window_bounds = array<i64: 4>}, {transform_indices = @transform_5, window_bounds = array<i64: 1, 4, 2, 128>}]} {
    %c0 = arith.constant 0 : index
    %c0_0 = arith.constant 0 : index
    %c0_1 = arith.constant 0 : index
    %c0_2 = arith.constant 0 : index
    %0 = vector.load %arg2[%c0, %c0_0, %c0_1, %c0_2] : memref<1x4x2x128xf32, #tpu.memory_space<vmem>>, vector<1x1x2x128xf32>
    %1 = vector.shape_cast %0 : vector<1x1x2x128xf32> to vector<2x128xf32>
    %c0_3 = arith.constant 0 : index
    %c1 = arith.constant 1 : index
    %c0_4 = arith.constant 0 : index
    %c0_5 = arith.constant 0 : index
    %2 = vector.load %arg2[%c0_3, %c1, %c0_4, %c0_5] : memref<1x4x2x128xf32, #tpu.memory_space<vmem>>, vector<1x1x2x128xf32>
    %3 = vector.shape_cast %2 : vector<1x1x2x128xf32> to vector<2x128xf32>
    %c0_6 = arith.constant 0 : index
    %c2 = arith.constant 2 : index
    %c0_7 = arith.constant 0 : index
    %c0_8 = arith.constant 0 : index
    %4 = vector.load %arg2[%c0_6, %c2, %c0_7, %c0_8] : memref<1x4x2x128xf32, #tpu.memory_space<vmem>>, vector<1x1x2x128xf32>
    %5 = vector.shape_cast %4 : vector<1x1x2x128xf32> to vector<2x128xf32>
    %c0_9 = arith.constant 0 : index
    %c3 = arith.constant 3 : index
    %c0_10 = arith.constant 0 : index
    %c0_11 = arith.constant 0 : index
    %6 = vector.load %arg2[%c0_9, %c3, %c0_10, %c0_11] : memref<1x4x2x128xf32, #tpu.memory_space<vmem>>, vector<1x1x2x128xf32>
    %7 = vector.shape_cast %6 : vector<1x1x2x128xf32> to vector<2x128xf32>
    %c0_12 = arith.constant 0 : index
    %c0_13 = arith.constant 0 : index
    %8 = memref.load %arg3[%c0_12, %c0_13] : memref<4x8xf32, #tpu.memory_space<smem>>
    %9 = vector.broadcast %8 : f32 to vector<2x128xf32>
    %10 = arith.mulf %1, %9 : vector<2x128xf32>
    %c1_14 = arith.constant 1 : index
    %c0_15 = arith.constant 0 : index
    %11 = memref.load %arg3[%c1_14, %c0_15] : memref<4x8xf32, #tpu.memory_space<smem>>
    %12 = vector.broadcast %11 : f32 to vector<2x128xf32>
    %13 = arith.mulf %3, %12 : vector<2x128xf32>
    %14 = arith.addf %10, %13 : vector<2x128xf32>
    %c2_16 = arith.constant 2 : index
    %c0_17 = arith.constant 0 : index
    %15 = memref.load %arg3[%c2_16, %c0_17] : memref<4x8xf32, #tpu.memory_space<smem>>
    %16 = vector.broadcast %15 : f32 to vector<2x128xf32>
    %17 = arith.mulf %5, %16 : vector<2x128xf32>
    %18 = arith.addf %14, %17 : vector<2x128xf32>
    %c3_18 = arith.constant 3 : index
    %c0_19 = arith.constant 0 : index
    %19 = memref.load %arg3[%c3_18, %c0_19] : memref<4x8xf32, #tpu.memory_space<smem>>
    %20 = vector.broadcast %19 : f32 to vector<2x128xf32>
    %21 = arith.mulf %7, %20 : vector<2x128xf32>
    %22 = arith.addf %18, %21 : vector<2x128xf32>
    %c0_20 = arith.constant 0 : index
    %23 = memref.load %arg4[%c0_20] : memref<8xf32, #tpu.memory_space<smem>>
    %24 = vector.broadcast %23 : f32 to vector<2x128xf32>
    %25 = arith.addf %22, %24 : vector<2x128xf32>
    %cst = arith.constant 0.000000e+00 : f32
    %26 = vector.broadcast %cst : f32 to vector<2x128xf32>
    %27 = arith.maximumf %25, %26 : vector<2x128xf32>
    %c0_21 = arith.constant 0 : index
    %c1_22 = arith.constant 1 : index
    %28 = memref.load %arg3[%c0_21, %c1_22] : memref<4x8xf32, #tpu.memory_space<smem>>
    %29 = vector.broadcast %28 : f32 to vector<2x128xf32>
    %30 = arith.mulf %1, %29 : vector<2x128xf32>
    %c1_23 = arith.constant 1 : index
    %c1_24 = arith.constant 1 : index
    %31 = memref.load %arg3[%c1_23, %c1_24] : memref<4x8xf32, #tpu.memory_space<smem>>
    %32 = vector.broadcast %31 : f32 to vector<2x128xf32>
    %33 = arith.mulf %3, %32 : vector<2x128xf32>
    %34 = arith.addf %30, %33 : vector<2x128xf32>
    %c2_25 = arith.constant 2 : index
    %c1_26 = arith.constant 1 : index
    %35 = memref.load %arg3[%c2_25, %c1_26] : memref<4x8xf32, #tpu.memory_space<smem>>
    %36 = vector.broadcast %35 : f32 to vector<2x128xf32>
    %37 = arith.mulf %5, %36 : vector<2x128xf32>
    %38 = arith.addf %34, %37 : vector<2x128xf32>
    %c3_27 = arith.constant 3 : index
    %c1_28 = arith.constant 1 : index
    %39 = memref.load %arg3[%c3_27, %c1_28] : memref<4x8xf32, #tpu.memory_space<smem>>
    %40 = vector.broadcast %39 : f32 to vector<2x128xf32>
    %41 = arith.mulf %7, %40 : vector<2x128xf32>
    %42 = arith.addf %38, %41 : vector<2x128xf32>
    %c1_29 = arith.constant 1 : index
    %43 = memref.load %arg4[%c1_29] : memref<8xf32, #tpu.memory_space<smem>>
    %44 = vector.broadcast %43 : f32 to vector<2x128xf32>
    %45 = arith.addf %42, %44 : vector<2x128xf32>
    %cst_30 = arith.constant 0.000000e+00 : f32
    %46 = vector.broadcast %cst_30 : f32 to vector<2x128xf32>
    %47 = arith.maximumf %45, %46 : vector<2x128xf32>
    %c0_31 = arith.constant 0 : index
    %c2_32 = arith.constant 2 : index
    %48 = memref.load %arg3[%c0_31, %c2_32] : memref<4x8xf32, #tpu.memory_space<smem>>
    %49 = vector.broadcast %48 : f32 to vector<2x128xf32>
    %50 = arith.mulf %1, %49 : vector<2x128xf32>
    %c1_33 = arith.constant 1 : index
    %c2_34 = arith.constant 2 : index
    %51 = memref.load %arg3[%c1_33, %c2_34] : memref<4x8xf32, #tpu.memory_space<smem>>
    %52 = vector.broadcast %51 : f32 to vector<2x128xf32>
    %53 = arith.mulf %3, %52 : vector<2x128xf32>
    %54 = arith.addf %50, %53 : vector<2x128xf32>
    %c2_35 = arith.constant 2 : index
    %c2_36 = arith.constant 2 : index
    %55 = memref.load %arg3[%c2_35, %c2_36] : memref<4x8xf32, #tpu.memory_space<smem>>
    %56 = vector.broadcast %55 : f32 to vector<2x128xf32>
    %57 = arith.mulf %5, %56 : vector<2x128xf32>
    %58 = arith.addf %54, %57 : vector<2x128xf32>
    %c3_37 = arith.constant 3 : index
    %c2_38 = arith.constant 2 : index
    %59 = memref.load %arg3[%c3_37, %c2_38] : memref<4x8xf32, #tpu.memory_space<smem>>
    %60 = vector.broadcast %59 : f32 to vector<2x128xf32>
    %61 = arith.mulf %7, %60 : vector<2x128xf32>
    %62 = arith.addf %58, %61 : vector<2x128xf32>
    %c2_39 = arith.constant 2 : index
    %63 = memref.load %arg4[%c2_39] : memref<8xf32, #tpu.memory_space<smem>>
    %64 = vector.broadcast %63 : f32 to vector<2x128xf32>
    %65 = arith.addf %62, %64 : vector<2x128xf32>
    %cst_40 = arith.constant 0.000000e+00 : f32
    %66 = vector.broadcast %cst_40 : f32 to vector<2x128xf32>
    %67 = arith.maximumf %65, %66 : vector<2x128xf32>
    %c0_41 = arith.constant 0 : index
    %c3_42 = arith.constant 3 : index
    %68 = memref.load %arg3[%c0_41, %c3_42] : memref<4x8xf32, #tpu.memory_space<smem>>
    %69 = vector.broadcast %68 : f32 to vector<2x128xf32>
    %70 = arith.mulf %1, %69 : vector<2x128xf32>
    %c1_43 = arith.constant 1 : index
    %c3_44 = arith.constant 3 : index
    %71 = memref.load %arg3[%c1_43, %c3_44] : memref<4x8xf32, #tpu.memory_space<smem>>
    %72 = vector.broadcast %71 : f32 to vector<2x128xf32>
    %73 = arith.mulf %3, %72 : vector<2x128xf32>
    %74 = arith.addf %70, %73 : vector<2x128xf32>
    %c2_45 = arith.constant 2 : index
    %c3_46 = arith.constant 3 : index
    %75 = memref.load %arg3[%c2_45, %c3_46] : memref<4x8xf32, #tpu.memory_space<smem>>
    %76 = vector.broadcast %75 : f32 to vector<2x128xf32>
    %77 = arith.mulf %5, %76 : vector<2x128xf32>
    %78 = arith.addf %74, %77 : vector<2x128xf32>
    %c3_47 = arith.constant 3 : index
    %c3_48 = arith.constant 3 : index
    %79 = memref.load %arg3[%c3_47, %c3_48] : memref<4x8xf32, #tpu.memory_space<smem>>
    %80 = vector.broadcast %79 : f32 to vector<2x128xf32>
    %81 = arith.mulf %7, %80 : vector<2x128xf32>
    %82 = arith.addf %78, %81 : vector<2x128xf32>
    %c3_49 = arith.constant 3 : index
    %83 = memref.load %arg4[%c3_49] : memref<8xf32, #tpu.memory_space<smem>>
    %84 = vector.broadcast %83 : f32 to vector<2x128xf32>
    %85 = arith.addf %82, %84 : vector<2x128xf32>
    %cst_50 = arith.constant 0.000000e+00 : f32
    %86 = vector.broadcast %cst_50 : f32 to vector<2x128xf32>
    %87 = arith.maximumf %85, %86 : vector<2x128xf32>
    %c0_51 = arith.constant 0 : index
    %c4 = arith.constant 4 : index
    %88 = memref.load %arg3[%c0_51, %c4] : memref<4x8xf32, #tpu.memory_space<smem>>
    %89 = vector.broadcast %88 : f32 to vector<2x128xf32>
    %90 = arith.mulf %1, %89 : vector<2x128xf32>
    %c1_52 = arith.constant 1 : index
    %c4_53 = arith.constant 4 : index
    %91 = memref.load %arg3[%c1_52, %c4_53] : memref<4x8xf32, #tpu.memory_space<smem>>
    %92 = vector.broadcast %91 : f32 to vector<2x128xf32>
    %93 = arith.mulf %3, %92 : vector<2x128xf32>
    %94 = arith.addf %90, %93 : vector<2x128xf32>
    %c2_54 = arith.constant 2 : index
    %c4_55 = arith.constant 4 : index
    %95 = memref.load %arg3[%c2_54, %c4_55] : memref<4x8xf32, #tpu.memory_space<smem>>
    %96 = vector.broadcast %95 : f32 to vector<2x128xf32>
    %97 = arith.mulf %5, %96 : vector<2x128xf32>
    %98 = arith.addf %94, %97 : vector<2x128xf32>
    %c3_56 = arith.constant 3 : index
    %c4_57 = arith.constant 4 : index
    %99 = memref.load %arg3[%c3_56, %c4_57] : memref<4x8xf32, #tpu.memory_space<smem>>
    %100 = vector.broadcast %99 : f32 to vector<2x128xf32>
    %101 = arith.mulf %7, %100 : vector<2x128xf32>
    %102 = arith.addf %98, %101 : vector<2x128xf32>
    %c4_58 = arith.constant 4 : index
    %103 = memref.load %arg4[%c4_58] : memref<8xf32, #tpu.memory_space<smem>>
    %104 = vector.broadcast %103 : f32 to vector<2x128xf32>
    %105 = arith.addf %102, %104 : vector<2x128xf32>
    %cst_59 = arith.constant 0.000000e+00 : f32
    %106 = vector.broadcast %cst_59 : f32 to vector<2x128xf32>
    %107 = arith.maximumf %105, %106 : vector<2x128xf32>
    %c0_60 = arith.constant 0 : index
    %c5 = arith.constant 5 : index
    %108 = memref.load %arg3[%c0_60, %c5] : memref<4x8xf32, #tpu.memory_space<smem>>
    %109 = vector.broadcast %108 : f32 to vector<2x128xf32>
    %110 = arith.mulf %1, %109 : vector<2x128xf32>
    %c1_61 = arith.constant 1 : index
    %c5_62 = arith.constant 5 : index
    %111 = memref.load %arg3[%c1_61, %c5_62] : memref<4x8xf32, #tpu.memory_space<smem>>
    %112 = vector.broadcast %111 : f32 to vector<2x128xf32>
    %113 = arith.mulf %3, %112 : vector<2x128xf32>
    %114 = arith.addf %110, %113 : vector<2x128xf32>
    %c2_63 = arith.constant 2 : index
    %c5_64 = arith.constant 5 : index
    %115 = memref.load %arg3[%c2_63, %c5_64] : memref<4x8xf32, #tpu.memory_space<smem>>
    %116 = vector.broadcast %115 : f32 to vector<2x128xf32>
    %117 = arith.mulf %5, %116 : vector<2x128xf32>
    %118 = arith.addf %114, %117 : vector<2x128xf32>
    %c3_65 = arith.constant 3 : index
    %c5_66 = arith.constant 5 : index
    %119 = memref.load %arg3[%c3_65, %c5_66] : memref<4x8xf32, #tpu.memory_space<smem>>
    %120 = vector.broadcast %119 : f32 to vector<2x128xf32>
    %121 = arith.mulf %7, %120 : vector<2x128xf32>
    %122 = arith.addf %118, %121 : vector<2x128xf32>
    %c5_67 = arith.constant 5 : index
    %123 = memref.load %arg4[%c5_67] : memref<8xf32, #tpu.memory_space<smem>>
    %124 = vector.broadcast %123 : f32 to vector<2x128xf32>
    %125 = arith.addf %122, %124 : vector<2x128xf32>
    %cst_68 = arith.constant 0.000000e+00 : f32
    %126 = vector.broadcast %cst_68 : f32 to vector<2x128xf32>
    %127 = arith.maximumf %125, %126 : vector<2x128xf32>
    %c0_69 = arith.constant 0 : index
    %c6 = arith.constant 6 : index
    %128 = memref.load %arg3[%c0_69, %c6] : memref<4x8xf32, #tpu.memory_space<smem>>
    %129 = vector.broadcast %128 : f32 to vector<2x128xf32>
    %130 = arith.mulf %1, %129 : vector<2x128xf32>
    %c1_70 = arith.constant 1 : index
    %c6_71 = arith.constant 6 : index
    %131 = memref.load %arg3[%c1_70, %c6_71] : memref<4x8xf32, #tpu.memory_space<smem>>
    %132 = vector.broadcast %131 : f32 to vector<2x128xf32>
    %133 = arith.mulf %3, %132 : vector<2x128xf32>
    %134 = arith.addf %130, %133 : vector<2x128xf32>
    %c2_72 = arith.constant 2 : index
    %c6_73 = arith.constant 6 : index
    %135 = memref.load %arg3[%c2_72, %c6_73] : memref<4x8xf32, #tpu.memory_space<smem>>
    %136 = vector.broadcast %135 : f32 to vector<2x128xf32>
    %137 = arith.mulf %5, %136 : vector<2x128xf32>
    %138 = arith.addf %134, %137 : vector<2x128xf32>
    %c3_74 = arith.constant 3 : index
    %c6_75 = arith.constant 6 : index
    %139 = memref.load %arg3[%c3_74, %c6_75] : memref<4x8xf32, #tpu.memory_space<smem>>
    %140 = vector.broadcast %139 : f32 to vector<2x128xf32>
    %141 = arith.mulf %7, %140 : vector<2x128xf32>
    %142 = arith.addf %138, %141 : vector<2x128xf32>
    %c6_76 = arith.constant 6 : index
    %143 = memref.load %arg4[%c6_76] : memref<8xf32, #tpu.memory_space<smem>>
    %144 = vector.broadcast %143 : f32 to vector<2x128xf32>
    %145 = arith.addf %142, %144 : vector<2x128xf32>
    %cst_77 = arith.constant 0.000000e+00 : f32
    %146 = vector.broadcast %cst_77 : f32 to vector<2x128xf32>
    %147 = arith.maximumf %145, %146 : vector<2x128xf32>
    %c0_78 = arith.constant 0 : index
    %c7 = arith.constant 7 : index
    %148 = memref.load %arg3[%c0_78, %c7] : memref<4x8xf32, #tpu.memory_space<smem>>
    %149 = vector.broadcast %148 : f32 to vector<2x128xf32>
    %150 = arith.mulf %1, %149 : vector<2x128xf32>
    %c1_79 = arith.constant 1 : index
    %c7_80 = arith.constant 7 : index
    %151 = memref.load %arg3[%c1_79, %c7_80] : memref<4x8xf32, #tpu.memory_space<smem>>
    %152 = vector.broadcast %151 : f32 to vector<2x128xf32>
    %153 = arith.mulf %3, %152 : vector<2x128xf32>
    %154 = arith.addf %150, %153 : vector<2x128xf32>
    %c2_81 = arith.constant 2 : index
    %c7_82 = arith.constant 7 : index
    %155 = memref.load %arg3[%c2_81, %c7_82] : memref<4x8xf32, #tpu.memory_space<smem>>
    %156 = vector.broadcast %155 : f32 to vector<2x128xf32>
    %157 = arith.mulf %5, %156 : vector<2x128xf32>
    %158 = arith.addf %154, %157 : vector<2x128xf32>
    %c3_83 = arith.constant 3 : index
    %c7_84 = arith.constant 7 : index
    %159 = memref.load %arg3[%c3_83, %c7_84] : memref<4x8xf32, #tpu.memory_space<smem>>
    %160 = vector.broadcast %159 : f32 to vector<2x128xf32>
    %161 = arith.mulf %7, %160 : vector<2x128xf32>
    %162 = arith.addf %158, %161 : vector<2x128xf32>
    %c7_85 = arith.constant 7 : index
    %163 = memref.load %arg4[%c7_85] : memref<8xf32, #tpu.memory_space<smem>>
    %164 = vector.broadcast %163 : f32 to vector<2x128xf32>
    %165 = arith.addf %162, %164 : vector<2x128xf32>
    %cst_86 = arith.constant 0.000000e+00 : f32
    %166 = vector.broadcast %cst_86 : f32 to vector<2x128xf32>
    %167 = arith.maximumf %165, %166 : vector<2x128xf32>
    %c0_87 = arith.constant 0 : index
    %c0_88 = arith.constant 0 : index
    %168 = memref.load %arg5[%c0_87, %c0_88] : memref<8x4xf32, #tpu.memory_space<smem>>
    %169 = vector.broadcast %168 : f32 to vector<2x128xf32>
    %170 = arith.mulf %27, %169 : vector<2x128xf32>
    %c1_89 = arith.constant 1 : index
    %c0_90 = arith.constant 0 : index
    %171 = memref.load %arg5[%c1_89, %c0_90] : memref<8x4xf32, #tpu.memory_space<smem>>
    %172 = vector.broadcast %171 : f32 to vector<2x128xf32>
    %173 = arith.mulf %47, %172 : vector<2x128xf32>
    %174 = arith.addf %170, %173 : vector<2x128xf32>
    %c2_91 = arith.constant 2 : index
    %c0_92 = arith.constant 0 : index
    %175 = memref.load %arg5[%c2_91, %c0_92] : memref<8x4xf32, #tpu.memory_space<smem>>
    %176 = vector.broadcast %175 : f32 to vector<2x128xf32>
    %177 = arith.mulf %67, %176 : vector<2x128xf32>
    %178 = arith.addf %174, %177 : vector<2x128xf32>
    %c3_93 = arith.constant 3 : index
    %c0_94 = arith.constant 0 : index
    %179 = memref.load %arg5[%c3_93, %c0_94] : memref<8x4xf32, #tpu.memory_space<smem>>
    %180 = vector.broadcast %179 : f32 to vector<2x128xf32>
    %181 = arith.mulf %87, %180 : vector<2x128xf32>
    %182 = arith.addf %178, %181 : vector<2x128xf32>
    %c4_95 = arith.constant 4 : index
    %c0_96 = arith.constant 0 : index
    %183 = memref.load %arg5[%c4_95, %c0_96] : memref<8x4xf32, #tpu.memory_space<smem>>
    %184 = vector.broadcast %183 : f32 to vector<2x128xf32>
    %185 = arith.mulf %107, %184 : vector<2x128xf32>
    %186 = arith.addf %182, %185 : vector<2x128xf32>
    %c5_97 = arith.constant 5 : index
    %c0_98 = arith.constant 0 : index
    %187 = memref.load %arg5[%c5_97, %c0_98] : memref<8x4xf32, #tpu.memory_space<smem>>
    %188 = vector.broadcast %187 : f32 to vector<2x128xf32>
    %189 = arith.mulf %127, %188 : vector<2x128xf32>
    %190 = arith.addf %186, %189 : vector<2x128xf32>
    %c6_99 = arith.constant 6 : index
    %c0_100 = arith.constant 0 : index
    %191 = memref.load %arg5[%c6_99, %c0_100] : memref<8x4xf32, #tpu.memory_space<smem>>
    %192 = vector.broadcast %191 : f32 to vector<2x128xf32>
    %193 = arith.mulf %147, %192 : vector<2x128xf32>
    %194 = arith.addf %190, %193 : vector<2x128xf32>
    %c7_101 = arith.constant 7 : index
    %c0_102 = arith.constant 0 : index
    %195 = memref.load %arg5[%c7_101, %c0_102] : memref<8x4xf32, #tpu.memory_space<smem>>
    %196 = vector.broadcast %195 : f32 to vector<2x128xf32>
    %197 = arith.mulf %167, %196 : vector<2x128xf32>
    %198 = arith.addf %194, %197 : vector<2x128xf32>
    %c0_103 = arith.constant 0 : index
    %199 = memref.load %arg6[%c0_103] : memref<4xf32, #tpu.memory_space<smem>>
    %200 = vector.broadcast %199 : f32 to vector<2x128xf32>
    %201 = arith.addf %198, %200 : vector<2x128xf32>
    %c0_104 = arith.constant 0 : index
    %c0_105 = arith.constant 0 : index
    %c0_106 = arith.constant 0 : index
    %c0_107 = arith.constant 0 : index
    %202 = vector.load %arg7[%c0_104, %c0_105, %c0_106, %c0_107] : memref<1x4x2x128xf32, #tpu.memory_space<vmem>>, vector<1x1x2x128xf32>
    %203 = vector.shape_cast %202 : vector<1x1x2x128xf32> to vector<2x128xf32>
    %204 = vector.shape_cast %201 : vector<2x128xf32> to vector<1x1x2x128xf32>
    tpu.vector_store %arg7[%c0_104, %c0_105, %c0_106, %c0_107], %204 {strides = array<i32>} : memref<1x4x2x128xf32, #tpu.memory_space<vmem>>, vector<1x1x2x128xf32>,
    %c0_108 = arith.constant 0 : index
    %c1_109 = arith.constant 1 : index
    %205 = memref.load %arg5[%c0_108, %c1_109] : memref<8x4xf32, #tpu.memory_space<smem>>
    %206 = vector.broadcast %205 : f32 to vector<2x128xf32>
    %207 = arith.mulf %27, %206 : vector<2x128xf32>
    %c1_110 = arith.constant 1 : index
    %c1_111 = arith.constant 1 : index
    %208 = memref.load %arg5[%c1_110, %c1_111] : memref<8x4xf32, #tpu.memory_space<smem>>
    %209 = vector.broadcast %208 : f32 to vector<2x128xf32>
    %210 = arith.mulf %47, %209 : vector<2x128xf32>
    %211 = arith.addf %207, %210 : vector<2x128xf32>
    %c2_112 = arith.constant 2 : index
    %c1_113 = arith.constant 1 : index
    %212 = memref.load %arg5[%c2_112, %c1_113] : memref<8x4xf32, #tpu.memory_space<smem>>
    %213 = vector.broadcast %212 : f32 to vector<2x128xf32>
    %214 = arith.mulf %67, %213 : vector<2x128xf32>
    %215 = arith.addf %211, %214 : vector<2x128xf32>
    %c3_114 = arith.constant 3 : index
    %c1_115 = arith.constant 1 : index
    %216 = memref.load %arg5[%c3_114, %c1_115] : memref<8x4xf32, #tpu.memory_space<smem>>
    %217 = vector.broadcast %216 : f32 to vector<2x128xf32>
    %218 = arith.mulf %87, %217 : vector<2x128xf32>
    %219 = arith.addf %215, %218 : vector<2x128xf32>
    %c4_116 = arith.constant 4 : index
    %c1_117 = arith.constant 1 : index
    %220 = memref.load %arg5[%c4_116, %c1_117] : memref<8x4xf32, #tpu.memory_space<smem>>
    %221 = vector.broadcast %220 : f32 to vector<2x128xf32>
    %222 = arith.mulf %107, %221 : vector<2x128xf32>
    %223 = arith.addf %219, %222 : vector<2x128xf32>
    %c5_118 = arith.constant 5 : index
    %c1_119 = arith.constant 1 : index
    %224 = memref.load %arg5[%c5_118, %c1_119] : memref<8x4xf32, #tpu.memory_space<smem>>
    %225 = vector.broadcast %224 : f32 to vector<2x128xf32>
    %226 = arith.mulf %127, %225 : vector<2x128xf32>
    %227 = arith.addf %223, %226 : vector<2x128xf32>
    %c6_120 = arith.constant 6 : index
    %c1_121 = arith.constant 1 : index
    %228 = memref.load %arg5[%c6_120, %c1_121] : memref<8x4xf32, #tpu.memory_space<smem>>
    %229 = vector.broadcast %228 : f32 to vector<2x128xf32>
    %230 = arith.mulf %147, %229 : vector<2x128xf32>
    %231 = arith.addf %227, %230 : vector<2x128xf32>
    %c7_122 = arith.constant 7 : index
    %c1_123 = arith.constant 1 : index
    %232 = memref.load %arg5[%c7_122, %c1_123] : memref<8x4xf32, #tpu.memory_space<smem>>
    %233 = vector.broadcast %232 : f32 to vector<2x128xf32>
    %234 = arith.mulf %167, %233 : vector<2x128xf32>
    %235 = arith.addf %231, %234 : vector<2x128xf32>
    %c1_124 = arith.constant 1 : index
    %236 = memref.load %arg6[%c1_124] : memref<4xf32, #tpu.memory_space<smem>>
    %237 = vector.broadcast %236 : f32 to vector<2x128xf32>
    %238 = arith.addf %235, %237 : vector<2x128xf32>
    %c0_125 = arith.constant 0 : index
    %c1_126 = arith.constant 1 : index
    %c0_127 = arith.constant 0 : index
    %c0_128 = arith.constant 0 : index
    %239 = vector.load %arg7[%c0_125, %c1_126, %c0_127, %c0_128] : memref<1x4x2x128xf32, #tpu.memory_space<vmem>>, vector<1x1x2x128xf32>
    %240 = vector.shape_cast %239 : vector<1x1x2x128xf32> to vector<2x128xf32>
    %241 = vector.shape_cast %238 : vector<2x128xf32> to vector<1x1x2x128xf32>
    tpu.vector_store %arg7[%c0_125, %c1_126, %c0_127, %c0_128], %241 {strides = array<i32>} : memref<1x4x2x128xf32, #tpu.memory_space<vmem>>, vector<1x1x2x128xf32>,
    %c0_129 = arith.constant 0 : index
    %c2_130 = arith.constant 2 : index
    %242 = memref.load %arg5[%c0_129, %c2_130] : memref<8x4xf32, #tpu.memory_space<smem>>
    %243 = vector.broadcast %242 : f32 to vector<2x128xf32>
    %244 = arith.mulf %27, %243 : vector<2x128xf32>
    %c1_131 = arith.constant 1 : index
    %c2_132 = arith.constant 2 : index
    %245 = memref.load %arg5[%c1_131, %c2_132] : memref<8x4xf32, #tpu.memory_space<smem>>
    %246 = vector.broadcast %245 : f32 to vector<2x128xf32>
    %247 = arith.mulf %47, %246 : vector<2x128xf32>
    %248 = arith.addf %244, %247 : vector<2x128xf32>
    %c2_133 = arith.constant 2 : index
    %c2_134 = arith.constant 2 : index
    %249 = memref.load %arg5[%c2_133, %c2_134] : memref<8x4xf32, #tpu.memory_space<smem>>
    %250 = vector.broadcast %249 : f32 to vector<2x128xf32>
    %251 = arith.mulf %67, %250 : vector<2x128xf32>
    %252 = arith.addf %248, %251 : vector<2x128xf32>
    %c3_135 = arith.constant 3 : index
    %c2_136 = arith.constant 2 : index
    %253 = memref.load %arg5[%c3_135, %c2_136] : memref<8x4xf32, #tpu.memory_space<smem>>
    %254 = vector.broadcast %253 : f32 to vector<2x128xf32>
    %255 = arith.mulf %87, %254 : vector<2x128xf32>
    %256 = arith.addf %252, %255 : vector<2x128xf32>
    %c4_137 = arith.constant 4 : index
    %c2_138 = arith.constant 2 : index
    %257 = memref.load %arg5[%c4_137, %c2_138] : memref<8x4xf32, #tpu.memory_space<smem>>
    %258 = vector.broadcast %257 : f32 to vector<2x128xf32>
    %259 = arith.mulf %107, %258 : vector<2x128xf32>
    %260 = arith.addf %256, %259 : vector<2x128xf32>
    %c5_139 = arith.constant 5 : index
    %c2_140 = arith.constant 2 : index
    %261 = memref.load %arg5[%c5_139, %c2_140] : memref<8x4xf32, #tpu.memory_space<smem>>
    %262 = vector.broadcast %261 : f32 to vector<2x128xf32>
    %263 = arith.mulf %127, %262 : vector<2x128xf32>
    %264 = arith.addf %260, %263 : vector<2x128xf32>
    %c6_141 = arith.constant 6 : index
    %c2_142 = arith.constant 2 : index
    %265 = memref.load %arg5[%c6_141, %c2_142] : memref<8x4xf32, #tpu.memory_space<smem>>
    %266 = vector.broadcast %265 : f32 to vector<2x128xf32>
    %267 = arith.mulf %147, %266 : vector<2x128xf32>
    %268 = arith.addf %264, %267 : vector<2x128xf32>
    %c7_143 = arith.constant 7 : index
    %c2_144 = arith.constant 2 : index
    %269 = memref.load %arg5[%c7_143, %c2_144] : memref<8x4xf32, #tpu.memory_space<smem>>
    %270 = vector.broadcast %269 : f32 to vector<2x128xf32>
    %271 = arith.mulf %167, %270 : vector<2x128xf32>
    %272 = arith.addf %268, %271 : vector<2x128xf32>
    %c2_145 = arith.constant 2 : index
    %273 = memref.load %arg6[%c2_145] : memref<4xf32, #tpu.memory_space<smem>>
    %274 = vector.broadcast %273 : f32 to vector<2x128xf32>
    %275 = arith.addf %272, %274 : vector<2x128xf32>
    %c0_146 = arith.constant 0 : index
    %c2_147 = arith.constant 2 : index
    %c0_148 = arith.constant 0 : index
    %c0_149 = arith.constant 0 : index
    %276 = vector.load %arg7[%c0_146, %c2_147, %c0_148, %c0_149] : memref<1x4x2x128xf32, #tpu.memory_space<vmem>>, vector<1x1x2x128xf32>
    %277 = vector.shape_cast %276 : vector<1x1x2x128xf32> to vector<2x128xf32>
    %278 = vector.shape_cast %275 : vector<2x128xf32> to vector<1x1x2x128xf32>
    tpu.vector_store %arg7[%c0_146, %c2_147, %c0_148, %c0_149], %278 {strides = array<i32>} : memref<1x4x2x128xf32, #tpu.memory_space<vmem>>, vector<1x1x2x128xf32>,
    %c0_150 = arith.constant 0 : index
    %c3_151 = arith.constant 3 : index
    %279 = memref.load %arg5[%c0_150, %c3_151] : memref<8x4xf32, #tpu.memory_space<smem>>
    %280 = vector.broadcast %279 : f32 to vector<2x128xf32>
    %281 = arith.mulf %27, %280 : vector<2x128xf32>
    %c1_152 = arith.constant 1 : index
    %c3_153 = arith.constant 3 : index
    %282 = memref.load %arg5[%c1_152, %c3_153] : memref<8x4xf32, #tpu.memory_space<smem>>
    %283 = vector.broadcast %282 : f32 to vector<2x128xf32>
    %284 = arith.mulf %47, %283 : vector<2x128xf32>
    %285 = arith.addf %281, %284 : vector<2x128xf32>
    %c2_154 = arith.constant 2 : index
    %c3_155 = arith.constant 3 : index
    %286 = memref.load %arg5[%c2_154, %c3_155] : memref<8x4xf32, #tpu.memory_space<smem>>
    %287 = vector.broadcast %286 : f32 to vector<2x128xf32>
    %288 = arith.mulf %67, %287 : vector<2x128xf32>
    %289 = arith.addf %285, %288 : vector<2x128xf32>
    %c3_156 = arith.constant 3 : index
    %c3_157 = arith.constant 3 : index
    %290 = memref.load %arg5[%c3_156, %c3_157] : memref<8x4xf32, #tpu.memory_space<smem>>
    %291 = vector.broadcast %290 : f32 to vector<2x128xf32>
    %292 = arith.mulf %87, %291 : vector<2x128xf32>
    %293 = arith.addf %289, %292 : vector<2x128xf32>
    %c4_158 = arith.constant 4 : index
    %c3_159 = arith.constant 3 : index
    %294 = memref.load %arg5[%c4_158, %c3_159] : memref<8x4xf32, #tpu.memory_space<smem>>
    %295 = vector.broadcast %294 : f32 to vector<2x128xf32>
    %296 = arith.mulf %107, %295 : vector<2x128xf32>
    %297 = arith.addf %293, %296 : vector<2x128xf32>
    %c5_160 = arith.constant 5 : index
    %c3_161 = arith.constant 3 : index
    %298 = memref.load %arg5[%c5_160, %c3_161] : memref<8x4xf32, #tpu.memory_space<smem>>
    %299 = vector.broadcast %298 : f32 to vector<2x128xf32>
    %300 = arith.mulf %127, %299 : vector<2x128xf32>
    %301 = arith.addf %297, %300 : vector<2x128xf32>
    %c6_162 = arith.constant 6 : index
    %c3_163 = arith.constant 3 : index
    %302 = memref.load %arg5[%c6_162, %c3_163] : memref<8x4xf32, #tpu.memory_space<smem>>
    %303 = vector.broadcast %302 : f32 to vector<2x128xf32>
    %304 = arith.mulf %147, %303 : vector<2x128xf32>
    %305 = arith.addf %301, %304 : vector<2x128xf32>
    %c7_164 = arith.constant 7 : index
    %c3_165 = arith.constant 3 : index
    %306 = memref.load %arg5[%c7_164, %c3_165] : memref<8x4xf32, #tpu.memory_space<smem>>
    %307 = vector.broadcast %306 : f32 to vector<2x128xf32>
    %308 = arith.mulf %167, %307 : vector<2x128xf32>
    %309 = arith.addf %305, %308 : vector<2x128xf32>
    %c3_166 = arith.constant 3 : index
    %310 = memref.load %arg6[%c3_166] : memref<4xf32, #tpu.memory_space<smem>>
    %311 = vector.broadcast %310 : f32 to vector<2x128xf32>
    %312 = arith.addf %309, %311 : vector<2x128xf32>
    %c0_167 = arith.constant 0 : index
    %c3_168 = arith.constant 3 : index
    %c0_169 = arith.constant 0 : index
    %c0_170 = arith.constant 0 : index
    %313 = vector.load %arg7[%c0_167, %c3_168, %c0_169, %c0_170] : memref<1x4x2x128xf32, #tpu.memory_space<vmem>>, vector<1x1x2x128xf32>
    %314 = vector.shape_cast %313 : vector<1x1x2x128xf32> to vector<2x128xf32>
    %315 = vector.shape_cast %312 : vector<2x128xf32> to vector<1x1x2x128xf32>
    tpu.vector_store %arg7[%c0_167, %c3_168, %c0_169, %c0_170], %315 {strides = array<i32>} : memref<1x4x2x128xf32, #tpu.memory_space<vmem>>, vector<1x1x2x128xf32>,
    return
  }
  func.func @transform_0(%arg0: i32, %arg1: i32) -> (i32, i32, i32, i32) {
    %c0_i32 = arith.constant 0 : i32
    %c0_i32_0 = arith.constant 0 : i32
    %c0_i32_1 = arith.constant 0 : i32
    return %arg0, %c0_i32, %arg1, %c0_i32_0 : i32, i32, i32, i32
  }
  func.func @transform_1(%arg0: i32, %arg1: i32) -> (i32, i32) {
    %c0_i32 = arith.constant 0 : i32
    %c0_i32_0 = arith.constant 0 : i32
    %c0_i32_1 = arith.constant 0 : i32
    return %c0_i32, %c0_i32_0 : i32, i32
  }
  func.func @transform_2(%arg0: i32, %arg1: i32) -> i32 {
    %c0_i32 = arith.constant 0 : i32
    %c0_i32_0 = arith.constant 0 : i32
    return %c0_i32 : i32
  }
  func.func @transform_3(%arg0: i32, %arg1: i32) -> (i32, i32) {
    %c0_i32 = arith.constant 0 : i32
    %c0_i32_0 = arith.constant 0 : i32
    %c0_i32_1 = arith.constant 0 : i32
    return %c0_i32, %c0_i32_0 : i32, i32
  }
  func.func @transform_4(%arg0: i32, %arg1: i32) -> i32 {
    %c0_i32 = arith.constant 0 : i32
    %c0_i32_0 = arith.constant 0 : i32
    return %c0_i32 : i32
  }
  func.func @transform_5(%arg0: i32, %arg1: i32) -> (i32, i32, i32, i32) {
    %c0_i32 = arith.constant 0 : i32
    %c0_i32_0 = arith.constant 0 : i32
    %c0_i32_1 = arith.constant 0 : i32
    return %arg0, %c0_i32, %arg1, %c0_i32_0 : i32, i32, i32, i32
  }
}

</mosaic_0001>

<llo_original>
// kernel: tpu_custom_call.1
$region0: #{tpu_custom_call.1}
  #allocation0 [shape = 'u32[]', space=smem, size = 0x4, offset = 0x4, fixed_abs, tag = 'smem constant byte address 0x4 - core index']
  #allocation1 [shape = 'u32[72,128]{1,0:T(1,128)}', space=vmem, size = 0x9000, scoped, tag = 'internal scratch']
  %s0 = inlined_call_operand.hbm [shape: f32[2,4,2,128], index: 0, kind: input, shape index: {}]
  %s1 = inlined_call_operand.vmem [shape: f32[4,8], index: 1, kind: input, shape index: {}]
  %s2 = inlined_call_operand.vmem [shape: f32[8], index: 2, kind: input, shape index: {}]
  %s3 = inlined_call_operand.vmem [shape: f32[8,4], index: 3, kind: input, shape index: {}]
  %s4 = inlined_call_operand.vmem [shape: f32[4], index: 4, kind: input, shape index: {}]
  %s5 = inlined_call_operand.hbm [shape: f32[2,4,2,128], index: 5, kind: output, shape index: {}]
  %s6 = sld [smem:[#allocation0]]
  $region73: #{tpu_custom_call.1} parent=0
    _
  %s8 = ssub.s32 1, %s6
  %s9 = scalar_select 0, %s8, %s6
  $region1: #{tpu_custom_call.1} parent=0
    #allocation2 [shape = 'u8[8192]{0}', space=vmem, size = 0x2000, scoped, tag = 'input window, operand 0']
    #allocation3 [shape = 's32[2]{0}', space=sflag, size = 0x8, scoped, tag = 'scoped memory for tpu_custom_call.1']
    #allocation4 [shape = 's32[2]{0}', space=sflag, size = 0x8, scoped, tag = 'scoped memory for tpu_custom_call.1']
    #allocation5 [shape = 's32[2]{0}', space=sflag, size = 0x8, scoped, tag = 'scoped memory for tpu_custom_call.1']
    #allocation6 [shape = 'u8[2048]{0}', space=smem, size = 0x800, scoped, tag = 'input window, operand 1, single buffered']
    #allocation7 [shape = 'u8[512]{0}', space=smem, size = 0x200, scoped, tag = 'input window, operand 2, single buffered']
    #allocation8 [shape = 's32[1]{0}', space=sflag, size = 0x4, scoped, tag = 'scoped memory for tpu_custom_call.1']
    #allocation9 [shape = 'u8[4096]{0}', space=smem, size = 0x1000, scoped, tag = 'input window, operand 3, single buffered']
    #allocation10 [shape = 'u8[512]{0}', space=smem, size = 0x200, scoped, tag = 'input window, operand 4, single buffered']
    #allocation11 [shape = 's32[1]{0}', space=sflag, size = 0x4, scoped, tag = 'scoped memory for tpu_custom_call.1']
    #allocation12 [shape = 'u8[8192]{0}', space=vmem, size = 0x2000, scoped, tag = 'output window, operand 0']
    %10 = vsyncpa [#allocation3], 0
    %s11 = scalar_lea.sflag [#allocation3], 1
    %12 = vsyncpa %s11, 0
    %13 = vsyncpa [#allocation5], 0
    %14 = vsyncpa [#allocation8], 0
    %15 = vsyncpa [#allocation11], 0
    %16 = vsyncpa [#allocation4], 0
    %s17 = scalar_lea.sflag [#allocation4], 1
    %18 = vsyncpa %s17, 0
    loop: start=0, step=1, limit=4
    $region2: #{tpu_custom_call.1} parent=1 // loop_pre_header
      _
    $region3: #{tpu_custom_call.1} parent=1 // loop_header
      %s20 = sphi 0, %s24
      %p21 = scmp.ge.s32.totalorder %s20, 4
      %s27 = sphi 0, %s39
      %s28 = sphi 0, %s35
      %s29 = sphi 0, %s27
      %s30 = sphi 0, %s28
      %s31 = sphi 0, %s29
      %s32 = sphi 0, %s30
      %s44 = sphi 0, %s46
      %s47 = sphi 0, %s44
      %s48 = sphi 0, %s47
      %s64 = sphi 0, %s48
      %s68 = sphi 0, %s68
      %s70 = sphi 0, %s68
      %s71 = sphi 0, %s70
      %s85 = sphi 0, %s71
      %s89 = sphi 0, %s89
      %s91 = sphi 0, %s89
      %s92 = sphi 0, %s91
      %s106 = sphi 0, %s92
      %s110 = sphi 0, %s110
      %s112 = sphi 0, %s110
      %s113 = sphi 0, %s112
      %s127 = sphi 0, %s113
      %s131 = sphi 0, %s131
      %s133 = sphi 0, %s131
      %s134 = sphi 0, %s133
      %s148 = sphi 0, %s134
      %s156 = sphi 0, %s158
      %s159 = sphi 0, %s156
      %s160 = sphi 0, %s159
      %s176 = sphi 0, %s160
    $region4: #{tpu_custom_call.1} parent=1 // loop_header_branch
      %23 = sbr.rel (%p21) target = $region8
    $region5: #{tpu_custom_call.1} parent=1 // loop_body
      %s25 = ssub.s32 %s20, 1
      %s26 = ssub.s32 %s20, 2
      %s33 = sadd.s32 1, %s28
      %p34 = scmp.ge.s32.totalorder %s33, 1
      %s35 = scalar_select %p34, 0, %s33
      %s36 = sadd.s32 1, %s27
      %s37 = scalar_select %p34, %s36, %s27
      %p38 = scmp.ge.s32.totalorder %s37, 2
      %s39 = scalar_select %p38, 0, %s37
      %s40 = ssub.s32 %s27, %s39
      %s41 = ssub.s32 %s28, %s35
      %s42 = sor.u32 %s40, %s41
      %p43 = scmp.eq.s32.totalorder %s42, 0
      %s45 = sadd.s32 %s44, 1
      %s46 = scalar_select %p43, %s44, %s45
      %p49 = pneg %p43
      %p50 = scmp.eq.s32.totalorder %s20, 1
      %p51 = por %p49, %p50
      %p52 = scmp.ne.s32.totalorder %s44, %s47
      %p53 = scmp.eq.s32.totalorder %s20, 0
      %p54 = por %p52, %p53
      %p55 = scmp.ne.s32.totalorder %s44, %s47
      %p56 = scmp.eq.s32.totalorder %s25, 1
      %p57 = por %p55, %p56
      %p58 = scmp.ne.s32.totalorder %s47, %s48
      %p59 = scmp.eq.s32.totalorder %s25, 0
      %p60 = por %p58, %p59
      %p61 = scmp.ne.s32.totalorder %s47, %s48
      %p62 = scmp.eq.s32.totalorder %s26, 1
      %p63 = por %p61, %p62
      %p65 = scmp.ne.s32.totalorder %s48, %s64
      %p66 = scmp.eq.s32.totalorder %s26, 0
      %p67 = por %p65, %p66
      %s69 = sadd.s32 %s68, 1
      %p72 = scmp.eq.s32.totalorder %s20, 1
      %p73 = scmp.ne.s32.totalorder %s68, %s70
      %p74 = scmp.eq.s32.totalorder %s20, 0
      %p75 = por %p73, %p74
      %p76 = scmp.ne.s32.totalorder %s68, %s70
      %p77 = scmp.eq.s32.totalorder %s25, 1
      %p78 = por %p76, %p77
      %p79 = scmp.ne.s32.totalorder %s70, %s71
      %p80 = scmp.eq.s32.totalorder %s25, 0
      %p81 = por %p79, %p80
      %p82 = scmp.ne.s32.totalorder %s70, %s71
      %p83 = scmp.eq.s32.totalorder %s26, 1
      %p84 = por %p82, %p83
      %p86 = scmp.ne.s32.totalorder %s71, %s85
      %p87 = scmp.eq.s32.totalorder %s26, 0
      %p88 = por %p86, %p87
      %s90 = sadd.s32 %s89, 1
      %p93 = scmp.eq.s32.totalorder %s20, 1
      %p94 = scmp.ne.s32.totalorder %s89, %s91
      %p95 = scmp.eq.s32.totalorder %s20, 0
      %p96 = por %p94, %p95
      %p97 = scmp.ne.s32.totalorder %s89, %s91
      %p98 = scmp.eq.s32.totalorder %s25, 1
      %p99 = por %p97, %p98
      %p100 = scmp.ne.s32.totalorder %s91, %s92
      %p101 = scmp.eq.s32.totalorder %s25, 0
      %p102 = por %p100, %p101
      %p103 = scmp.ne.s32.totalorder %s91, %s92
      %p104 = scmp.eq.s32.totalorder %s26, 1
      %p105 = por %p103, %p104
      %p107 = scmp.ne.s32.totalorder %s92, %s106
      %p108 = scmp.eq.s32.totalorder %s26, 0
      %p109 = por %p107, %p108
      %s111 = sadd.s32 %s110, 1
      %p114 = scmp.eq.s32.totalorder %s20, 1
      %p115 = scmp.ne.s32.totalorder %s110, %s112
      %p116 = scmp.eq.s32.totalorder %s20, 0
      %p117 = por %p115, %p116
      %p118 = scmp.ne.s32.totalorder %s110, %s112
      %p119 = scmp.eq.s32.totalorder %s25, 1
      %p120 = por %p118, %p119
      %p121 = scmp.ne.s32.totalorder %s112, %s113
      %p122 = scmp.eq.s32.totalorder %s25, 0
      %p123 = por %p121, %p122
      %p124 = scmp.ne.s32.totalorder %s112, %s113
      %p125 = scmp.eq.s32.totalorder %s26, 1
      %p126 = por %p124, %p125
      %p128 = scmp.ne.s32.totalorder %s113, %s127
      %p129 = scmp.eq.s32.totalorder %s26, 0
      %p130 = por %p128, %p129
      %s132 = sadd.s32 %s131, 1
      %p135 = scmp.eq.s32.totalorder %s20, 1
      %p136 = scmp.ne.s32.totalorder %s131, %s133
      %p137 = scmp.eq.s32.totalorder %s20, 0
      %p138 = por %p136, %p137
      %p139 = scmp.ne.s32.totalorder %s131, %s133
      %p140 = scmp.eq.s32.totalorder %s25, 1
      %p141 = por %p139, %p140
      %p142 = scmp.ne.s32.totalorder %s133, %s134
      %p143 = scmp.eq.s32.totalorder %s25, 0
      %p144 = por %p142, %p143
      %p145 = scmp.ne.s32.totalorder %s133, %s134
      %p146 = scmp.eq.s32.totalorder %s26, 1
      %p147 = por %p145, %p146
      %p149 = scmp.ne.s32.totalorder %s134, %s148
      %p150 = scmp.eq.s32.totalorder %s26, 0
      %p151 = por %p149, %p150
      %s152 = ssub.s32 %s27, %s39
      %s153 = ssub.s32 %s28, %s35
      %s154 = sor.u32 %s152, %s153
      %p155 = scmp.eq.s32.totalorder %s154, 0
      %s157 = sadd.s32 %s156, 1
      %s158 = scalar_select %p155, %s156, %s157
      %p161 = pneg %p155
      %p162 = scmp.eq.s32.totalorder %s20, 1
      %p163 = por %p161, %p162
      %p164 = scmp.ne.s32.totalorder %s156, %s159
      %p165 = scmp.eq.s32.totalorder %s20, 0
      %p166 = por %p164, %p165
      %p167 = scmp.ne.s32.totalorder %s156, %s159
      %p168 = scmp.eq.s32.totalorder %s25, 1
      %p169 = por %p167, %p168
      %p170 = scmp.ne.s32.totalorder %s159, %s160
      %p171 = scmp.eq.s32.totalorder %s25, 0
      %p172 = por %p170, %p171
      %p173 = scmp.ne.s32.totalorder %s159, %s160
      %p174 = scmp.eq.s32.totalorder %s26, 1
      %p175 = por %p173, %p174
      %p177 = scmp.ne.s32.totalorder %s160, %s176
      %p178 = scmp.eq.s32.totalorder %s26, 0
      %p179 = por %p177, %p178
      %p180 = scmp.le.s32.totalorder 1, %s20
      %p181 = scmp.lt.s32.totalorder %s20, 3
      %p182 = pnand %p180, %p181
      %p183 = pneg %p182
      // Predicated region
      $region9: #{tpu_custom_call.1} parent=5 // pred_check
        _
      $region10: #{tpu_custom_call.1} parent=5 // pred_check_branch
        %185 = sbr.rel (%p182) target = $region12
      $region11: #{tpu_custom_call.1} parent=5 // pred_region
        %s186 = ssub.s32 %s20, 1
        // Predicated region
        $region13: #{tpu_custom_call.1} parent=11 // pred_check
          %p187 = pneg %p81
        $region14: #{tpu_custom_call.1} parent=11 // pred_check_branch
          %189 = sbr.rel (%p187) target = $region16
        $region15: #{tpu_custom_call.1} parent=11 // pred_region
          %191 = vsyncadd [#allocation5], 0
          %s193 = sshll.u32 %s1, 4
          %s194 = int_to_ptr.vmem [resolvable:$true] %s193
          %196 = dma.vmem_to_smem %s194, 64, [#allocation6], [#allocation5]
        $region16: #{tpu_custom_call.1} parent=11 // pred_fallthru
          _
        // Predicated region
        $region17: #{tpu_custom_call.1} parent=11 // pred_check
          %p197 = pneg %p102
        $region18: #{tpu_custom_call.1} parent=11 // pred_check_branch
          %199 = sbr.rel (%p197) target = $region20
        $region19: #{tpu_custom_call.1} parent=11 // pred_region
          %201 = vsyncadd [#allocation8], 0
          %s203 = sshll.u32 %s2, 4
          %s204 = int_to_ptr.vmem [resolvable:$true] %s203
          %206 = dma.vmem_to_smem %s204, 16, [#allocation7], [#allocation8]
        $region20: #{tpu_custom_call.1} parent=11 // pred_fallthru
          _
        // Predicated region
        $region21: #{tpu_custom_call.1} parent=11 // pred_check
          %p207 = pneg %p123
        $region22: #{tpu_custom_call.1} parent=11 // pred_check_branch
          %209 = sbr.rel (%p207) target = $region24
        $region23: #{tpu_custom_call.1} parent=11 // pred_region
          %211 = vsyncadd [#allocation8], 0
          %s213 = sshll.u32 %s3, 4
          %s214 = int_to_ptr.vmem [resolvable:$true] %s213
          %216 = dma.vmem_to_smem %s214, 128, [#allocation9], [#allocation8]
        $region24: #{tpu_custom_call.1} parent=11 // pred_fallthru
          _
        // Predicated region
        $region25: #{tpu_custom_call.1} parent=11 // pred_check
          %p217 = pneg %p144
        $region26: #{tpu_custom_call.1} parent=11 // pred_check_branch
          %219 = sbr.rel (%p217) target = $region28
        $region27: #{tpu_custom_call.1} parent=11 // pred_region
          %221 = vsyncadd [#allocation11], 0
          %s223 = sshll.u32 %s4, 4
          %s224 = int_to_ptr.vmem [resolvable:$true] %s223
          %226 = dma.vmem_to_smem %s224, 16, [#allocation10], [#allocation11]
        $region28: #{tpu_custom_call.1} parent=11 // pred_fallthru
          _
      $region12: #{tpu_custom_call.1} parent=5 // pred_fallthru
        _
      %p227 = scmp.lt.s32.totalorder %s20, 2
      // Predicated region
      $region29: #{tpu_custom_call.1} parent=5 // pred_check
        %p228 = pneg %p227
      $region30: #{tpu_custom_call.1} parent=5 // pred_check_branch
        %230 = sbr.rel (%p228) target = $region32
      $region31: #{tpu_custom_call.1} parent=5 // pred_region
        // Predicated region
        $region33: #{tpu_custom_call.1} parent=31 // pred_check
          %p231 = pneg %p54
        $region34: #{tpu_custom_call.1} parent=31 // pred_check_branch
          %233 = sbr.rel (%p231) target = $region36
        $region35: #{tpu_custom_call.1} parent=31 // pred_region
          %s234 = sand.u32 %s44, 1
          %s235 = scalar_lea.sflag [#allocation3], %s234
          %s236 = sand.u32 %s44, 1
          %s237 = smul.addr %s236, 8
          %s238 = scalar_lea.vmem [#allocation2], %s237
          %240 = vsyncadd %s235, 0
          %s241 = smul.addr %s27, 4
          %s242 = sadd.s32 %s28, %s241
          %s243 = smul.addr %s242, 2
          %s244 = scalar_lea.hbm %s0, %s243
          %s245 = sshll.u32 %s244, 4
          %s246 = int_to_ptr.hbm [resolvable:$true] %s245
          %s247 = sshll.u32 %s238, 4
          %s248 = int_to_ptr.vmem [resolvable:$true] %s247
          %253 = dma.hbm_to_vmem [thread:$0]  %s246, 128, %s248, %s235, 32, 32, 2
        $region36: #{tpu_custom_call.1} parent=31 // pred_fallthru
          _
      $region32: #{tpu_custom_call.1} parent=5 // pred_fallthru
        _
      %p254 = scmp.le.s32.totalorder 1, %s20
      %p255 = scmp.lt.s32.totalorder %s20, 3
      %p256 = pnand %p254, %p255
      %p257 = pneg %p256
      // Predicated region
      $region37: #{tpu_custom_call.1} parent=5 // pred_check
        _
      $region38: #{tpu_custom_call.1} parent=5 // pred_check_branch
        %259 = sbr.rel (%p256) target = $region40
      $region39: #{tpu_custom_call.1} parent=5 // pred_region
        %s260 = ssub.s32 %s20, 1
        %s261 = sand.u32 %s47, 1
        %s262 = scalar_lea.sflag [#allocation3], %s261
        %s263 = sand.u32 %s47, 1
        %s264 = smul.addr %s263, 8
        %s265 = scalar_lea.vmem [#allocation2], %s264
        // Predicated region
        $region41: #{tpu_custom_call.1} parent=39 // pred_check
          %p266 = pneg %p60
        $region42: #{tpu_custom_call.1} parent=39 // pred_check_branch
          %268 = sbr.rel (%p266) target = $region44
        $region43: #{tpu_custom_call.1} parent=39 // pred_region
          %270 = dma.done %s262, 128
        $region44: #{tpu_custom_call.1} parent=39 // pred_fallthru
          _
        // Predicated region
        $region45: #{tpu_custom_call.1} parent=39 // pred_check
          %p271 = pneg %p81
        $region46: #{tpu_custom_call.1} parent=39 // pred_check_branch
          %273 = sbr.rel (%p271) target = $region48
        $region47: #{tpu_custom_call.1} parent=39 // pred_region
          %275 = dma.done [#allocation5], 64
        $region48: #{tpu_custom_call.1} parent=39 // pred_fallthru
          _
        // Predicated region
        $region49: #{tpu_custom_call.1} parent=39 // pred_check
          %p276 = pneg %p102
        $region50: #{tpu_custom_call.1} parent=39 // pred_check_branch
          %278 = sbr.rel (%p276) target = $region52
        $region51: #{tpu_custom_call.1} parent=39 // pred_region
          %280 = dma.done [#allocation8], 16
        $region52: #{tpu_custom_call.1} parent=39 // pred_fallthru
          _
        // Predicated region
        $region53: #{tpu_custom_call.1} parent=39 // pred_check
          %p281 = pneg %p123
        $region54: #{tpu_custom_call.1} parent=39 // pred_check_branch
          %283 = sbr.rel (%p281) target = $region56
        $region55: #{tpu_custom_call.1} parent=39 // pred_region
          %285 = dma.done [#allocation8], 128
        $region56: #{tpu_custom_call.1} parent=39 // pred_fallthru
          _
        // Predicated region
        $region57: #{tpu_custom_call.1} parent=39 // pred_check
          %p286 = pneg %p144
        $region58: #{tpu_custom_call.1} parent=39 // pred_check_branch
          %288 = sbr.rel (%p286) target = $region60
        $region59: #{tpu_custom_call.1} parent=39 // pred_region
          %290 = dma.done [#allocation11], 16
        $region60: #{tpu_custom_call.1} parent=39 // pred_fallthru
          _
        %291 = sfence
        %s292 = sand.u32 %s47, 1
        %s293 = scalar_lea.sflag [#allocation3], %s292
        %s294 = sand.u32 %s47, 1
        %s295 = smul.addr %s294, 8
        %s296 = scalar_lea.vmem [#allocation2], %s295
        %p297 = pneg %p60
        %p298 = pneg %p57
        %p299 = pneg %p81
        %p300 = pneg %p78
        %p301 = pneg %p102
        %p302 = pneg %p99
        %p303 = pneg %p123
        %p304 = pneg %p120
        %p305 = pneg %p144
        %p306 = pneg %p141
        %p307 = pneg %p172
        %p308 = pneg %p169
        %s309 = sand.u32 %s159, 1
        %s310 = scalar_lea.sflag [#allocation4], %s309
        %s311 = sand.u32 %s159, 1
        %s312 = smul.addr %s311, 8
        %s313 = scalar_lea.vmem [#allocation12], %s312
        %v314 = vld [vmem:[%s265] sm:$0x3]
        %s315 = scalar_lea.vmem %s265, 2 [#allocation2]
        %v316 = vld [vmem:[%s315] sm:$0x3]
        %s317 = scalar_lea.vmem %s265, 4 [#allocation2]
        %v318 = vld [vmem:[%s317] sm:$0x3]
        %s319 = scalar_lea.vmem %s265, 6 [#allocation2]
        %v320 = vld [vmem:[%s319] sm:$0x3]
        %s321 = sld [smem:[#allocation6]]
        %v322 = vstv %s321
        %v323 = vmul.f32 %v314, %v322
        %s324 = sld [smem:[#allocation6 + $0x80]]
        %v325 = vstv %s324
        %v326 = vmul.f32 %v316, %v325
        %v327 = vadd.f32 %v323, %v326
        %s328 = sld [smem:[#allocation6 + $0x100]]
        %v329 = vstv %s328
        %v330 = vmul.f32 %v318, %v329
        %v331 = vadd.f32 %v327, %v330
        %s332 = sld [smem:[#allocation6 + $0x180]]
        %v333 = vstv %s332
        %v334 = vmul.f32 %v320, %v333
        %v335 = vadd.f32 %v331, %v334
        %s336 = sld [smem:[#allocation7]]
        %v337 = vstv %s336
        %v338 = vadd.f32 %v335, %v337
        %v339 = vmax.f32 %v338, 0.0
        %s340 = sld [smem:[#allocation6 + $0x1]]
        %v341 = vstv %s340
        %v342 = vmul.f32 %v314, %v341
        %s343 = sld [smem:[#allocation6 + $0x81]]
        %v344 = vstv %s343
        %v345 = vmul.f32 %v316, %v344
        %v346 = vadd.f32 %v342, %v345
        %s347 = sld [smem:[#allocation6 + $0x101]]
        %v348 = vstv %s347
        %v349 = vmul.f32 %v318, %v348
        %v350 = vadd.f32 %v346, %v349
        %s351 = sld [smem:[#allocation6 + $0x181]]
        %v352 = vstv %s351
        %v353 = vmul.f32 %v320, %v352
        %v354 = vadd.f32 %v350, %v353
        %s355 = sld [smem:[#allocation7 + $0x1]]
        %v356 = vstv %s355
        %v357 = vadd.f32 %v354, %v356
        %v358 = vmax.f32 %v357, 0.0
        %s359 = sld [smem:[#allocation6 + $0x2]]
        %v360 = vstv %s359
        %v361 = vmul.f32 %v314, %v360
        %s362 = sld [smem:[#allocation6 + $0x82]]
        %v363 = vstv %s362
        %v364 = vmul.f32 %v316, %v363
        %v365 = vadd.f32 %v361, %v364
        %s366 = sld [smem:[#allocation6 + $0x102]]
        %v367 = vstv %s366
        %v368 = vmul.f32 %v318, %v367
        %v369 = vadd.f32 %v365, %v368
        %s370 = sld [smem:[#allocation6 + $0x182]]
        %v371 = vstv %s370
        %v372 = vmul.f32 %v320, %v371
        %v373 = vadd.f32 %v369, %v372
        %s374 = sld [smem:[#allocation7 + $0x2]]
        %v375 = vstv %s374
        %v376 = vadd.f32 %v373, %v375
        %v377 = vmax.f32 %v376, 0.0
        %s378 = sld [smem:[#allocation6 + $0x3]]
        %v379 = vstv %s378
        %v380 = vmul.f32 %v314, %v379
        %s381 = sld [smem:[#allocation6 + $0x83]]
        %v382 = vstv %s381
        %v383 = vmul.f32 %v316, %v382
        %v384 = vadd.f32 %v380, %v383
        %s385 = sld [smem:[#allocation6 + $0x103]]
        %v386 = vstv %s385
        %v387 = vmul.f32 %v318, %v386
        %v388 = vadd.f32 %v384, %v387
        %s389 = sld [smem:[#allocation6 + $0x183]]
        %v390 = vstv %s389
        %v391 = vmul.f32 %v320, %v390
        %v392 = vadd.f32 %v388, %v391
        %s393 = sld [smem:[#allocation7 + $0x3]]
        %v394 = vstv %s393
        %v395 = vadd.f32 %v392, %v394
        %v396 = vmax.f32 %v395, 0.0
        %s397 = sld [smem:[#allocation6 + $0x4]]
        %v398 = vstv %s397
        %v399 = vmul.f32 %v314, %v398
        %s400 = sld [smem:[#allocation6 + $0x84]]
        %v401 = vstv %s400
        %v402 = vmul.f32 %v316, %v401
        %v403 = vadd.f32 %v399, %v402
        %s404 = sld [smem:[#allocation6 + $0x104]]
        %v405 = vstv %s404
        %v406 = vmul.f32 %v318, %v405
        %v407 = vadd.f32 %v403, %v406
        %s408 = sld [smem:[#allocation6 + $0x184]]
        %v409 = vstv %s408
        %v410 = vmul.f32 %v320, %v409
        %v411 = vadd.f32 %v407, %v410
        %s412 = sld [smem:[#allocation7 + $0x4]]
        %v413 = vstv %s412
        %v414 = vadd.f32 %v411, %v413
        %v415 = vmax.f32 %v414, 0.0
        %s416 = sld [smem:[#allocation6 + $0x5]]
        %v417 = vstv %s416
        %v418 = vmul.f32 %v314, %v417
        %s419 = sld [smem:[#allocation6 + $0x85]]
        %v420 = vstv %s419
        %v421 = vmul.f32 %v316, %v420
        %v422 = vadd.f32 %v418, %v421
        %s423 = sld [smem:[#allocation6 + $0x105]]
        %v424 = vstv %s423
        %v425 = vmul.f32 %v318, %v424
        %v426 = vadd.f32 %v422, %v425
        %s427 = sld [smem:[#allocation6 + $0x185]]
        %v428 = vstv %s427
        %v429 = vmul.f32 %v320, %v428
        %v430 = vadd.f32 %v426, %v429
        %s431 = sld [smem:[#allocation7 + $0x5]]
        %v432 = vstv %s431
        %v433 = vadd.f32 %v430, %v432
        %v434 = vmax.f32 %v433, 0.0
        %s435 = sld [smem:[#allocation6 + $0x6]]
        %v436 = vstv %s435
        %v437 = vmul.f32 %v314, %v436
        %s438 = sld [smem:[#allocation6 + $0x86]]
        %v439 = vstv %s438
        %v440 = vmul.f32 %v316, %v439
        %v441 = vadd.f32 %v437, %v440
        %s442 = sld [smem:[#allocation6 + $0x106]]
        %v443 = vstv %s442
        %v444 = vmul.f32 %v318, %v443
        %v445 = vadd.f32 %v441, %v444
        %s446 = sld [smem:[#allocation6 + $0x186]]
        %v447 = vstv %s446
        %v448 = vmul.f32 %v320, %v447
        %v449 = vadd.f32 %v445, %v448
        %s450 = sld [smem:[#allocation7 + $0x6]]
        %v451 = vstv %s450
        %v452 = vadd.f32 %v449, %v451
        %v453 = vmax.f32 %v452, 0.0
        %s454 = sld [smem:[#allocation6 + $0x7]]
        %v455 = vstv %s454
        %v456 = vmul.f32 %v314, %v455
        %s457 = sld [smem:[#allocation6 + $0x87]]
        %v458 = vstv %s457
        %v459 = vmul.f32 %v316, %v458
        %v460 = vadd.f32 %v456, %v459
        %s461 = sld [smem:[#allocation6 + $0x107]]
        %v462 = vstv %s461
        %v463 = vmul.f32 %v318, %v462
        %v464 = vadd.f32 %v460, %v463
        %s465 = sld [smem:[#allocation6 + $0x187]]
        %v466 = vstv %s465
        %v467 = vmul.f32 %v320, %v466
        %v468 = vadd.f32 %v464, %v467
        %s469 = sld [smem:[#allocation7 + $0x7]]
        %v470 = vstv %s469
        %v471 = vadd.f32 %v468, %v470
        %v472 = vmax.f32 %v471, 0.0
        %s473 = sld [smem:[#allocation9]]
        %v474 = vstv %s473
        %v475 = vmul.f32 %v339, %v474
        %s476 = sld [smem:[#allocation9 + $0x80]]
        %v477 = vstv %s476
        %v478 = vmul.f32 %v358, %v477
        %v479 = vadd.f32 %v475, %v478
        %s480 = sld [smem:[#allocation9 + $0x100]]
        %v481 = vstv %s480
        %v482 = vmul.f32 %v377, %v481
        %v483 = vadd.f32 %v479, %v482
        %s484 = sld [smem:[#allocation9 + $0x180]]
        %v485 = vstv %s484
        %v486 = vmul.f32 %v396, %v485
        %v487 = vadd.f32 %v483, %v486
        %s488 = sld [smem:[#allocation9 + $0x200]]
        %v489 = vstv %s488
        %v490 = vmul.f32 %v415, %v489
        %v491 = vadd.f32 %v487, %v490
        %s492 = sld [smem:[#allocation9 + $0x280]]
        %v493 = vstv %s492
        %v494 = vmul.f32 %v434, %v493
        %v495 = vadd.f32 %v491, %v494
        %s496 = sld [smem:[#allocation9 + $0x300]]
        %v497 = vstv %s496
        %v498 = vmul.f32 %v453, %v497
        %v499 = vadd.f32 %v495, %v498
        %s500 = sld [smem:[#allocation9 + $0x380]]
        %v501 = vstv %s500
        %v502 = vmul.f32 %v472, %v501
        %v503 = vadd.f32 %v499, %v502
        %s504 = sld [smem:[#allocation10]]
        %v505 = vstv %s504
        %v506 = vadd.f32 %v503, %v505
        %507 = vst [vmem:[%s313] sm:$0x3] %v506
        %s508 = sld [smem:[#allocation9 + $0x1]]
        %v509 = vstv %s508
        %v510 = vmul.f32 %v339, %v509
        %s511 = sld [smem:[#allocation9 + $0x81]]
        %v512 = vstv %s511
        %v513 = vmul.f32 %v358, %v512
        %v514 = vadd.f32 %v510, %v513
        %s515 = sld [smem:[#allocation9 + $0x101]]
        %v516 = vstv %s515
        %v517 = vmul.f32 %v377, %v516
        %v518 = vadd.f32 %v514, %v517
        %s519 = sld [smem:[#allocation9 + $0x181]]
        %v520 = vstv %s519
        %v521 = vmul.f32 %v396, %v520
        %v522 = vadd.f32 %v518, %v521
        %s523 = sld [smem:[#allocation9 + $0x201]]
        %v524 = vstv %s523
        %v525 = vmul.f32 %v415, %v524
        %v526 = vadd.f32 %v522, %v525
        %s527 = sld [smem:[#allocation9 + $0x281]]
        %v528 = vstv %s527
        %v529 = vmul.f32 %v434, %v528
        %v530 = vadd.f32 %v526, %v529
        %s531 = sld [smem:[#allocation9 + $0x301]]
        %v532 = vstv %s531
        %v533 = vmul.f32 %v453, %v532
        %v534 = vadd.f32 %v530, %v533
        %s535 = sld [smem:[#allocation9 + $0x381]]
        %v536 = vstv %s535
        %v537 = vmul.f32 %v472, %v536
        %v538 = vadd.f32 %v534, %v537
        %s539 = sld [smem:[#allocation10 + $0x1]]
        %v540 = vstv %s539
        %v541 = vadd.f32 %v538, %v540
        %s542 = scalar_lea.vmem %s313, 2 [#allocation12]
        %543 = vst [vmem:[%s542] sm:$0x3] %v541
        %s544 = sld [smem:[#allocation9 + $0x2]]
        %v545 = vstv %s544
        %v546 = vmul.f32 %v339, %v545
        %s547 = sld [smem:[#allocation9 + $0x82]]
        %v548 = vstv %s547
        %v549 = vmul.f32 %v358, %v548
        %v550 = vadd.f32 %v546, %v549
        %s551 = sld [smem:[#allocation9 + $0x102]]
        %v552 = vstv %s551
        %v553 = vmul.f32 %v377, %v552
        %v554 = vadd.f32 %v550, %v553
        %s555 = sld [smem:[#allocation9 + $0x182]]
        %v556 = vstv %s555
        %v557 = vmul.f32 %v396, %v556
        %v558 = vadd.f32 %v554, %v557
        %s559 = sld [smem:[#allocation9 + $0x202]]
        %v560 = vstv %s559
        %v561 = vmul.f32 %v415, %v560
        %v562 = vadd.f32 %v558, %v561
        %s563 = sld [smem:[#allocation9 + $0x282]]
        %v564 = vstv %s563
        %v565 = vmul.f32 %v434, %v564
        %v566 = vadd.f32 %v562, %v565
        %s567 = sld [smem:[#allocation9 + $0x302]]
        %v568 = vstv %s567
        %v569 = vmul.f32 %v453, %v568
        %v570 = vadd.f32 %v566, %v569
        %s571 = sld [smem:[#allocation9 + $0x382]]
        %v572 = vstv %s571
        %v573 = vmul.f32 %v472, %v572
        %v574 = vadd.f32 %v570, %v573
        %s575 = sld [smem:[#allocation10 + $0x2]]
        %v576 = vstv %s575
        %v577 = vadd.f32 %v574, %v576
        %s578 = scalar_lea.vmem %s313, 4 [#allocation12]
        %579 = vst [vmem:[%s578] sm:$0x3] %v577
        %s580 = sld [smem:[#allocation9 + $0x3]]
        %v581 = vstv %s580
        %v582 = vmul.f32 %v339, %v581
        %s583 = sld [smem:[#allocation9 + $0x83]]
        %v584 = vstv %s583
        %v585 = vmul.f32 %v358, %v584
        %v586 = vadd.f32 %v582, %v585
        %s587 = sld [smem:[#allocation9 + $0x103]]
        %v588 = vstv %s587
        %v589 = vmul.f32 %v377, %v588
        %v590 = vadd.f32 %v586, %v589
        %s591 = sld [smem:[#allocation9 + $0x183]]
        %v592 = vstv %s591
        %v593 = vmul.f32 %v396, %v592
        %v594 = vadd.f32 %v590, %v593
        %s595 = sld [smem:[#allocation9 + $0x203]]
        %v596 = vstv %s595
        %v597 = vmul.f32 %v415, %v596
        %v598 = vadd.f32 %v594, %v597
        %s599 = sld [smem:[#allocation9 + $0x283]]
        %v600 = vstv %s599
        %v601 = vmul.f32 %v434, %v600
        %v602 = vadd.f32 %v598, %v601
        %s603 = sld [smem:[#allocation9 + $0x303]]
        %v604 = vstv %s603
        %v605 = vmul.f32 %v453, %v604
        %v606 = vadd.f32 %v602, %v605
        %s607 = sld [smem:[#allocation9 + $0x383]]
        %v608 = vstv %s607
        %v609 = vmul.f32 %v472, %v608
        %v610 = vadd.f32 %v606, %v609
        %s611 = sld [smem:[#allocation10 + $0x3]]
        %v612 = vstv %s611
        %v613 = vadd.f32 %v610, %v612
        %s614 = scalar_lea.vmem %s313, 6 [#allocation12]
        %615 = vst [vmem:[%s614] sm:$0x3] %v613
        %s616 = sand.u32 %s159, 1
        %s617 = scalar_lea.sflag [#allocation4], %s616
        %s618 = sand.u32 %s159, 1
        %s619 = smul.addr %s618, 8
        %s620 = scalar_lea.vmem [#allocation12], %s619
        // Predicated region
        $region61: #{tpu_custom_call.1} parent=39 // pred_check
          %p621 = pneg %p169
        $region62: #{tpu_custom_call.1} parent=39 // pred_check_branch
          %623 = sbr.rel (%p621) target = $region64
        $region63: #{tpu_custom_call.1} parent=39 // pred_region
          %625 = vsyncadd %s617, 0
          %s626 = smul.addr %s29, 4
          %s627 = sadd.s32 %s30, %s626
          %s628 = smul.addr %s627, 2
          %s629 = scalar_lea.hbm %s5, %s628
          %s630 = sshll.u32 %s620, 4
          %s631 = int_to_ptr.vmem [resolvable:$true] %s630
          %s632 = sshll.u32 %s629, 4
          %s633 = int_to_ptr.hbm [resolvable:$true] %s632
          %638 = dma.vmem_to_hbm [thread:$0]  %s631, 128, %s633, %s617, 32, 32, 2
        $region64: #{tpu_custom_call.1} parent=39 // pred_fallthru
          _
      $region40: #{tpu_custom_call.1} parent=5 // pred_fallthru
        _
      %p639 = scmp.le.s32.totalorder 2, %s20
      // Predicated region
      $region65: #{tpu_custom_call.1} parent=5 // pred_check
        %p640 = pneg %p639
      $region66: #{tpu_custom_call.1} parent=5 // pred_check_branch
        %642 = sbr.rel (%p640) target = $region68
      $region67: #{tpu_custom_call.1} parent=5 // pred_region
        %s643 = ssub.s32 %s20, 2
        // Predicated region
        $region69: #{tpu_custom_call.1} parent=67 // pred_check
          %p644 = pneg %p175
        $region70: #{tpu_custom_call.1} parent=67 // pred_check_branch
          %646 = sbr.rel (%p644) target = $region72
        $region71: #{tpu_custom_call.1} parent=67 // pred_region
          %s647 = sand.u32 %s160, 1
          %s648 = scalar_lea.sflag [#allocation4], %s647
          %s649 = sand.u32 %s160, 1
          %s650 = smul.addr %s649, 8
          %s651 = scalar_lea.vmem [#allocation12], %s650
          %653 = dma.done %s648, 128
        $region72: #{tpu_custom_call.1} parent=67 // pred_fallthru
          _
      $region68: #{tpu_custom_call.1} parent=5 // pred_fallthru
        _
    $region6: #{tpu_custom_call.1} parent=1 // loop_footer
      %s24 = sadd.s32 1, %s20
    $region7: #{tpu_custom_call.1} parent=1 // loop_footer_branch
      %19 = sbr.rel target = $region3
    $region8: #{tpu_custom_call.1} parent=1 // loop_exit
      _
    %654 = vsyncpa [#allocation3], 1
    %s655 = scalar_lea.sflag [#allocation3], 1
    %656 = vsyncpa %s655, 1
    %657 = vsyncpa [#allocation4], 1
    %s658 = scalar_lea.sflag [#allocation4], 1
    %659 = vsyncpa %s658, 1
    %660 = vsyncpa [#allocation5], 1
    %s661 = scalar_lea.sflag [#allocation5], 1
    %662 = vsyncpa %s661, 1
    %663 = vsyncpa [#allocation8], 1
    %664 = vsyncpa [#allocation11], 1

</llo_original>
